<compile_context>
chip_gen: v6e
topology: v6e:2x2x1
jax: 0.10.0
libtpu: 0.0.40
codegen_flags: <defaults>
</compile_context>

<pallas_src>
import functools
import math

import jax
import jax.numpy as jnp
from jax.experimental import pallas as pl
from jax.experimental.pallas import tpu as pltpu


# --------------------------------------------------------------------------- #
# In-kernel N(0,1) sampling (TPU-only path).                                   #
# --------------------------------------------------------------------------- #
def _rand_1_2(shape):
    """Uniform f32 in [1, 2) with 23-bit resolution via exponent stuffing."""
    bits = pltpu.prng_random_bits(shape)
    if bits.dtype != jnp.uint32:
        bits = pltpu.bitcast(bits, jnp.uint32)
    stuffed = (bits >> jnp.uint32(9)) | jnp.uint32(0x3F800000)
    return pltpu.bitcast(stuffed, jnp.float32)


def _box_muller_pair(shape):
    """One Box-Muller evaluation of `shape` -> (z0, z1), both ~N(0,1)."""
    u1 = 2.0 - _rand_1_2(shape)                         # (0, 1]  (log-safe)
    u2 = _rand_1_2(shape) - 1.0                         # [0, 1)
    r = jnp.sqrt(-2.0 * jnp.log(u1))
    theta = jnp.float32(2.0 * math.pi) * u2
    return r * jnp.cos(theta), r * jnp.sin(theta)


def _standard_normal(shape):
    """N(0,1) draw of `shape`, using both Box-Muller outputs when possible."""
    rows, lanes = shape
    if lanes % 256 == 0:
        # Draw at half the lane width (still >= (8,128) aligned) and use both
        # outputs -> half the PRNG / log / sqrt / trig work per element.
        z0, z1 = _box_muller_pair((rows, lanes // 2))
        return jnp.concatenate([z0, z1], axis=-1)
    z0, _ = _box_muller_pair(shape)
    return z0


# --------------------------------------------------------------------------- #
# Kernels                                                                      #
# --------------------------------------------------------------------------- #
def _kernel_prng(seed_ref, x_ref, mus_ref, rhos_ref, o_ref, *, upper_bound):
    # Seed per grid step so the stream is deterministic for a given (seed, step)
    # regardless of how steps are scheduled across TensorCores.
    pltpu.prng_seed(seed_ref[0], pl.program_id(0))
    eps = _standard_normal(x_ref.shape)
    rhos = rhos_ref[...].astype(jnp.float32)
    sigma = (1.0 + jnp.tanh(rhos)) * (0.5 * upper_bound)     # tanh -> EUP slot
    noise = sigma * eps + mus_ref[...].astype(jnp.float32)
    o_ref[...] = (x_ref[...].astype(jnp.float32) + noise).astype(o_ref.dtype)


def _kernel_eps(x_ref, mus_ref, rhos_ref, eps_ref, o_ref, *, upper_bound):
    rhos = rhos_ref[...].astype(jnp.float32)
    sigma = (1.0 + jnp.tanh(rhos)) * (0.5 * upper_bound)
    noise = sigma * eps_ref[...].astype(jnp.float32) + mus_ref[...].astype(jnp.float32)
    o_ref[...] = (x_ref[...].astype(jnp.float32) + noise).astype(o_ref.dtype)


# --------------------------------------------------------------------------- #
# Slab / tile planning                                                         #
# --------------------------------------------------------------------------- #
def _round_up(x, m):
    return ((x + m - 1) // m) * m


def _vmem_budget_bytes():
    """Total VMEM budget for (streams x 2 buffers), per chip generation."""
    dev = jax.devices()[0]
    if dev.platform != "tpu":
        return 8 << 20
    kind = (getattr(dev, "device_kind", "") or "").lower()
    if "v5 lite" in kind or "v5lite" in kind or "v5e" in kind:
        return 12 << 20          # v5e scoped-VMEM default is 16 MiB
    return 24 << 20              # v6e / v7x scoped-VMEM default is 32 MiB


def _plan_tiling(total, sub_req, itemsize, n_streams, budget_bytes):
    """Pick a lane-dense padded slab (rows, lanes) and a row-tile size tr.

    Guarantees: lanes is a multiple of 128, rows == steps * tr, tr is a multiple
    of sub_req, and (n_streams x 2 x tr x lanes x itemsize) <= budget.
    """
    # Widest lane count that doesn't make the slab mostly padding.
    for lanes in (1024, 512, 256, 128):
        if total >= lanes * sub_req or lanes == 128:
            break
    rows_raw = -(-total // lanes)
    rows_min = _round_up(rows_raw, sub_req)

    per_tile = budget_bytes // (n_streams * 2)               # double-buffered
    cap = max(sub_req, (per_tile // (lanes * itemsize)) // sub_req * sub_req)

    if rows_min <= cap:
        if rows_min >= 2 * sub_req:
            # Force >= 2 grid steps so megacore (v7x) can shard the axis.
            tr = _round_up(-(-rows_min // 2), sub_req)
            steps = 2
        else:
            tr, steps = rows_min, 1
    else:
        tr = cap
        steps = -(-rows_min // tr)
    rows = steps * tr
    return rows, lanes, tr, steps


# --------------------------------------------------------------------------- #
# Wrapper                                                                      #
# --------------------------------------------------------------------------- #
def noisy_activation(x, mus, rhos, seed, upper_bound):
    """Forward pass of NoisyActivation.

    `seed` must be advanced per call so the noise draw is fresh each forward
    (mirrors Normal(0,1).sample per call).  For many small parameter tensors,
    concatenate them (and their mus/rhos) into one flattened call to amortize
    launch overhead.
    """
    orig_shape = x.shape
    total = int(x.size)
    on_tpu = jax.devices()[0].platform == "tpu"

    itemsizes = [jnp.dtype(a.dtype).itemsize for a in (x, mus, rhos)]
    sub_req = 32 // min(itemsizes)          # 8 for f32, 16 for bf16, 32 for int8
    n_streams = 4 if on_tpu else 5          # x, mus, rhos, (eps,) out
    budget = _vmem_budget_bytes()
    rows, lanes, tr, steps = _plan_tiling(total, sub_req, max(itemsizes),
                                          n_streams, budget)
    padded = rows * lanes

    def to_slab(a):
        f = a.reshape(-1)
        if padded != total:
            f = jnp.pad(f, (0, padded - total))
        return f.reshape(rows, lanes)

    x2, mus2, rhos2 = to_slab(x), to_slab(mus), to_slab(rhos)
    data_spec = pl.BlockSpec((tr, lanes), lambda i: (i, 0))

    bytes_accessed = padded * (2 * jnp.dtype(x.dtype).itemsize     # x in + out
                               + jnp.dtype(mus.dtype).itemsize
                               + jnp.dtype(rhos.dtype).itemsize
                               + (0 if on_tpu else 4))             # eps stream
    cost = pl.CostEstimate(flops=10 * padded,
                           transcendentals=4 * padded,
                           bytes_accessed=int(bytes_accessed))
    cparams = pltpu.CompilerParams(
        dimension_semantics=("parallel",),                         # megacore on v7x
        vmem_limit_bytes=int(min(budget + (8 << 20), 48 << 20)),
    )

    if on_tpu:
        seed_arr = jnp.asarray([seed], dtype=jnp.int32)
        out2 = pl.pallas_call(
            functools.partial(_kernel_prng, upper_bound=float(upper_bound)),
            out_shape=jax.ShapeDtypeStruct((rows, lanes), x.dtype),
            grid=(steps,),
            in_specs=[
                pl.BlockSpec(memory_space=pltpu.MemorySpace.SMEM),  # seed scalar
                data_spec,                                           # x
                data_spec,                                           # mus
                data_spec,                                           # rhos
            ],
            out_specs=data_spec,
            compiler_params=cparams,
            cost_estimate=cost,
        )(seed_arr, x2, mus2, rhos2)
    else:
        # Non-TPU / interpret fallback: the hardware PRNG primitives have no
        # lowering here, so sample eps on the host side (same semantics as the
        # PyTorch Normal(0,1).sample) and stream it in as a tiled input.
        eps2 = jax.random.normal(jax.random.PRNGKey(seed), (rows, lanes),
                                 dtype=jnp.float32)
        out2 = pl.pallas_call(
            functools.partial(_kernel_eps, upper_bound=float(upper_bound)),
            out_shape=jax.ShapeDtypeStruct((rows, lanes), x.dtype),
            grid=(steps,),
            in_specs=[data_spec, data_spec, data_spec, data_spec],
            out_specs=data_spec,
            compiler_params=cparams,
            cost_estimate=cost,
        )(x2, mus2, rhos2, eps2)

    out_flat = out2.reshape(-1)
    if padded != total:
        out_flat = out_flat[:total]
    return out_flat.reshape(orig_shape)


def inner_loss(rhos, upper_bound):
    """-log((1/n) * sum(sigma**2)) — tiny reduction, plain JAX is fine."""
    sigma = (1.0 + jnp.tanh(rhos)) * 0.5 * upper_bound
    return -jnp.log(jnp.sum(sigma ** 2) / sigma.size)


# --------------------------------------------------------------------------- #
# Self-test                                                                    #
# --------------------------------------------------------------------------- #
if __name__ == "__main__":
    shape = (2, 4, 16, 16)       # NCHW; per-element parameters match this shape
    upper_bound = 0.5
    threshold = 0.25             # unused in forward; kept for parity with __init__

    key = jax.random.PRNGKey(0)
    k_x, k_mus, k_rhos, k_x_alt = jax.random.split(key, 4)

    x = jax.random.normal(k_x, shape, dtype=jnp.float32)
    mus = 0.2 * jax.random.normal(k_mus, shape, dtype=jnp.float32)   # init normal(0, 0.2)
    rhos = jax.random.normal(k_rhos, shape, dtype=jnp.float32)       # init normal(0, 1)

    seed = 1234  # in real training advance this every forward call
    out = jax.block_until_ready(noisy_activation(x, mus, rhos, seed, upper_bound))
    assert out.shape == shape
    assert bool(jnp.all(jnp.isfinite(out)))

    # Recover the noise draw implied by the output and check (a) it is ~N(0,1)
    # and (b) the elementwise math matches the PyTorch forward given that draw.
    sigma_ref = (1.0 + jnp.tanh(rhos)) * 0.5 * upper_bound
    eps_implied = (out - x - mus) / sigma_ref
    assert abs(float(jnp.mean(eps_implied))) < 0.15
    assert 0.8 < float(jnp.std(eps_implied)) < 1.2

    # Same seed => same eps: a different input must reproduce x + sigma*eps + mus.
    x_alt = jax.random.normal(k_x_alt, shape, dtype=jnp.float32)
    out_alt = jax.block_until_ready(noisy_activation(x_alt, mus, rhos, seed, upper_bound))
    ref_alt = x_alt + sigma_ref * eps_implied + mus
    assert jnp.allclose(out_alt, ref_alt, atol=1e-3, rtol=1e-3)

    # Awkward (non-128-divisible) shape exercises the padded-slab path.
    shape2 = (3, 5, 7)
    k2x, k2m, k2r = jax.random.split(jax.random.PRNGKey(7), 3)
    x2 = jax.random.normal(k2x, shape2, dtype=jnp.float32)
    mus2 = 0.2 * jax.random.normal(k2m, shape2, dtype=jnp.float32)
    rhos2 = jax.random.normal(k2r, shape2, dtype=jnp.float32)
    out2 = jax.block_until_ready(noisy_activation(x2, mus2, rhos2, 99, upper_bound))
    assert out2.shape == shape2
    assert bool(jnp.all(jnp.isfinite(out2)))

    _ = jax.block_until_ready(inner_loss(rhos, upper_bound))

    print("KERNEL_OK")
</pallas_src>

<mosaic_0001>
module attributes {stable_mosaic.version = 11 : i64} {
  func.func @_kernel_eps(%arg0: i32, %arg1: memref<8x256xf32, #tpu.memory_space<vmem>>, %arg2: memref<8x256xf32, #tpu.memory_space<vmem>>, %arg3: memref<8x256xf32, #tpu.memory_space<vmem>>, %arg4: memref<8x256xf32, #tpu.memory_space<vmem>>, %arg5: memref<8x256xf32, #tpu.memory_space<vmem>>) attributes {dimension_semantics = [#tpu.dimension_semantics<parallel>], iteration_bounds = array<i64: 1>, scalar_prefetch = 0 : i64, scratch_operands = 0 : i64, tpu.core_type = #tpu.core_type<tc>, window_params = [{transform_indices = @transform_0, window_bounds = array<i64: 8, 256>}, {transform_indices = @transform_1, window_bounds = array<i64: 8, 256>}, {transform_indices = @transform_2, window_bounds = array<i64: 8, 256>}, {transform_indices = @transform_3, window_bounds = array<i64: 8, 256>}, {transform_indices = @transform_4, window_bounds = array<i64: 8, 256>}]} {
    %c0 = arith.constant 0 : index
    %c0_0 = arith.constant 0 : index
    %0 = vector.load %arg3[%c0, %c0_0] : memref<8x256xf32, #tpu.memory_space<vmem>>, vector<8x256xf32>
    %1 = math.tanh %0 : vector<8x256xf32>
    %cst = arith.constant 1.000000e+00 : f32
    %2 = vector.broadcast %cst : f32 to vector<8x256xf32>
    %3 = arith.addf %2, %1 : vector<8x256xf32>
    %cst_1 = arith.constant 2.500000e-01 : f32
    %4 = vector.broadcast %cst_1 : f32 to vector<8x256xf32>
    %5 = arith.mulf %3, %4 : vector<8x256xf32>
    %c0_2 = arith.constant 0 : index
    %c0_3 = arith.constant 0 : index
    %6 = vector.load %arg4[%c0_2, %c0_3] : memref<8x256xf32, #tpu.memory_space<vmem>>, vector<8x256xf32>
    %7 = arith.mulf %5, %6 : vector<8x256xf32>
    %c0_4 = arith.constant 0 : index
    %c0_5 = arith.constant 0 : index
    %8 = vector.load %arg2[%c0_4, %c0_5] : memref<8x256xf32, #tpu.memory_space<vmem>>, vector<8x256xf32>
    %9 = arith.addf %7, %8 : vector<8x256xf32>
    %c0_6 = arith.constant 0 : index
    %c0_7 = arith.constant 0 : index
    %10 = vector.load %arg1[%c0_6, %c0_7] : memref<8x256xf32, #tpu.memory_space<vmem>>, vector<8x256xf32>
    %11 = arith.addf %10, %9 : vector<8x256xf32>
    %c0_8 = arith.constant 0 : index
    %c0_9 = arith.constant 0 : index
    %12 = vector.load %arg5[%c0_8, %c0_9] : memref<8x256xf32, #tpu.memory_space<vmem>>, vector<8x256xf32>
    tpu.vector_store %arg5[%c0_8, %c0_9], %11 {strides = array<i32>} : memref<8x256xf32, #tpu.memory_space<vmem>>, vector<8x256xf32>,
    return
  }
  func.func @transform_0(%arg0: i32) -> (i32, i32) {
    %c0_i32 = arith.constant 0 : i32
    %c0_i32_0 = arith.constant 0 : i32
    return %arg0, %c0_i32 : i32, i32
  }
  func.func @transform_1(%arg0: i32) -> (i32, i32) {
    %c0_i32 = arith.constant 0 : i32
    %c0_i32_0 = arith.constant 0 : i32
    return %arg0, %c0_i32 : i32, i32
  }
  func.func @transform_2(%arg0: i32) -> (i32, i32) {
    %c0_i32 = arith.constant 0 : i32
    %c0_i32_0 = arith.constant 0 : i32
    return %arg0, %c0_i32 : i32, i32
  }
  func.func @transform_3(%arg0: i32) -> (i32, i32) {
    %c0_i32 = arith.constant 0 : i32
    %c0_i32_0 = arith.constant 0 : i32
    return %arg0, %c0_i32 : i32, i32
  }
  func.func @transform_4(%arg0: i32) -> (i32, i32) {
    %c0_i32 = arith.constant 0 : i32
    %c0_i32_0 = arith.constant 0 : i32
    return %arg0, %c0_i32 : i32, i32
  }
}

</mosaic_0001>

<llo_original>
// kernel: tpu_custom_call.1
$region0: #{tpu_custom_call.1}
  #allocation0 [shape = 'u32[]', space=smem, size = 0x4, offset = 0x4, fixed_abs, tag = 'smem constant byte address 0x4 - core index']
  #allocation1 [shape = 'u32[144,128]{1,0:T(1,128)}', space=vmem, size = 0x12000, scoped, tag = 'internal scratch']
  %s0 = inlined_call_operand.hbm [shape: f32[8,256], index: 0, kind: input, shape index: {}]
  %s1 = inlined_call_operand.hbm [shape: f32[8,256], index: 1, kind: input, shape index: {}]
  %s2 = inlined_call_operand.hbm [shape: f32[8,256], index: 2, kind: input, shape index: {}]
  %s3 = inlined_call_operand.hbm [shape: f32[8,256], index: 3, kind: input, shape index: {}]
  %s4 = inlined_call_operand.hbm [shape: f32[8,256], index: 4, kind: output, shape index: {}]
  %s5 = sld [smem:[#allocation0]]
  $region42: #{tpu_custom_call.1} parent=0
    _
  %s7 = ssub.s32 1, %s5
  %s8 = scalar_select 0, %s7, %s5
  $region1: #{tpu_custom_call.1} parent=0
    #allocation2 [shape = 'u8[8192]{0}', space=vmem, size = 0x2000, scoped, tag = 'input window, operand 0, single buffered']
    #allocation3 [shape = 's32[1]{0}', space=sflag, size = 0x4, scoped, tag = 'scoped memory for tpu_custom_call.1']
    #allocation4 [shape = 's32[1]{0}', space=sflag, size = 0x4, scoped, tag = 'scoped memory for tpu_custom_call.1']
    #allocation5 [shape = 'u8[8192]{0}', space=vmem, size = 0x2000, scoped, tag = 'input window, operand 1, single buffered']
    #allocation6 [shape = 's32[1]{0}', space=sflag, size = 0x4, scoped, tag = 'scoped memory for tpu_custom_call.1']
    #allocation7 [shape = 'u8[8192]{0}', space=vmem, size = 0x2000, scoped, tag = 'input window, operand 2, single buffered']
    #allocation8 [shape = 'u8[8192]{0}', space=vmem, size = 0x2000, scoped, tag = 'input window, operand 3, single buffered']
    #allocation9 [shape = 's32[1]{0}', space=sflag, size = 0x4, scoped, tag = 'scoped memory for tpu_custom_call.1']
    #allocation10 [shape = 'u8[8192]{0}', space=vmem, size = 0x2000, scoped, tag = 'output window, operand 0, single buffered']
    %9 = vsyncpa [#allocation3], 0
    %10 = vsyncpa [#allocation6], 0
    %11 = vsyncpa [#allocation9], 0
    %12 = vsyncpa [#allocation4], 0
    // Predicated region
    $region2: #{tpu_custom_call.1} parent=1 // pred_check
      _
    $region3: #{tpu_custom_call.1} parent=1 // pred_check_branch
      %14 = sbr.rel (0) target = $region5
    $region4: #{tpu_custom_call.1} parent=1 // pred_region
      %s16 = ssub.s32 256, 256
      %17 = vsyncadd [#allocation3], %s16
      %s19 = sshll.u32 [#allocation2], 4
      %s20 = int_to_ptr.vmem [resolvable:$true] %s19
      %22 = dma.hbm_to_vmem [thread:$0]  %s0, 256, %s20, [#allocation3]
    $region5: #{tpu_custom_call.1} parent=1 // pred_fallthru
      _
    // Predicated region
    $region6: #{tpu_custom_call.1} parent=1 // pred_check
      _
    $region7: #{tpu_custom_call.1} parent=1 // pred_check_branch
      %24 = sbr.rel (0) target = $region9
    $region8: #{tpu_custom_call.1} parent=1 // pred_region
      %s26 = ssub.s32 256, 256
      %27 = vsyncadd [#allocation6], %s26
      %s29 = sshll.u32 [#allocation5], 4
      %s30 = int_to_ptr.vmem [resolvable:$true] %s29
      %32 = dma.hbm_to_vmem [thread:$0]  %s1, 256, %s30, [#allocation6]
    $region9: #{tpu_custom_call.1} parent=1 // pred_fallthru
      _
    // Predicated region
    $region10: #{tpu_custom_call.1} parent=1 // pred_check
      _
    $region11: #{tpu_custom_call.1} parent=1 // pred_check_branch
      %34 = sbr.rel (0) target = $region13
    $region12: #{tpu_custom_call.1} parent=1 // pred_region
      %s36 = ssub.s32 256, 256
      %37 = vsyncadd [#allocation6], %s36
      %s39 = sshll.u32 [#allocation7], 4
      %s40 = int_to_ptr.vmem [resolvable:$true] %s39
      %42 = dma.hbm_to_vmem [thread:$0]  %s2, 256, %s40, [#allocation6]
    $region13: #{tpu_custom_call.1} parent=1 // pred_fallthru
      _
    // Predicated region
    $region14: #{tpu_custom_call.1} parent=1 // pred_check
      _
    $region15: #{tpu_custom_call.1} parent=1 // pred_check_branch
      %44 = sbr.rel (0) target = $region17
    $region16: #{tpu_custom_call.1} parent=1 // pred_region
      %s46 = ssub.s32 256, 256
      %47 = vsyncadd [#allocation9], %s46
      %s49 = sshll.u32 [#allocation8], 4
      %s50 = int_to_ptr.vmem [resolvable:$true] %s49
      %52 = dma.hbm_to_vmem [thread:$0]  %s3, 256, %s50, [#allocation9]
    $region17: #{tpu_custom_call.1} parent=1 // pred_fallthru
      _
    // Predicated region
    $region18: #{tpu_custom_call.1} parent=1 // pred_check
      _
    $region19: #{tpu_custom_call.1} parent=1 // pred_check_branch
      %54 = sbr.rel (0) target = $region21
    $region20: #{tpu_custom_call.1} parent=1 // pred_region
      %55 = dma.done [#allocation3], 256
    $region21: #{tpu_custom_call.1} parent=1 // pred_fallthru
      _
    // Predicated region
    $region22: #{tpu_custom_call.1} parent=1 // pred_check
      _
    $region23: #{tpu_custom_call.1} parent=1 // pred_check_branch
      %57 = sbr.rel (0) target = $region25
    $region24: #{tpu_custom_call.1} parent=1 // pred_region
      %58 = dma.done [#allocation6], 256
    $region25: #{tpu_custom_call.1} parent=1 // pred_fallthru
      _
    // Predicated region
    $region26: #{tpu_custom_call.1} parent=1 // pred_check
      _
    $region27: #{tpu_custom_call.1} parent=1 // pred_check_branch
      %60 = sbr.rel (0) target = $region29
    $region28: #{tpu_custom_call.1} parent=1 // pred_region
      %61 = dma.done [#allocation6], 256
    $region29: #{tpu_custom_call.1} parent=1 // pred_fallthru
      _
    // Predicated region
    $region30: #{tpu_custom_call.1} parent=1 // pred_check
      _
    $region31: #{tpu_custom_call.1} parent=1 // pred_check_branch
      %63 = sbr.rel (0) target = $region33
    $region32: #{tpu_custom_call.1} parent=1 // pred_region
      %64 = dma.done [#allocation9], 256
    $region33: #{tpu_custom_call.1} parent=1 // pred_fallthru
      _
    %v65 = vld [vmem:[#allocation7] sm:$0xff]
    %v66 = vld [vmem:[#allocation7 + $0x8] sm:$0xff]
    %v67 = vtanh.pop %v65
    %v68 = vtanh.pop %v66
    %v69 = vadd.f32 %v67, 1.0
    %v70 = vadd.f32 %v68, 1.0
    %v71 = vmul.f32 %v69, 0.25
    %v72 = vmul.f32 %v70, 0.25
    %v73 = vld [vmem:[#allocation8] sm:$0xff]
    %v74 = vld [vmem:[#allocation8 + $0x8] sm:$0xff]
    %v75 = vmul.f32 %v71, %v73
    %v76 = vmul.f32 %v72, %v74
    %v77 = vld [vmem:[#allocation5] sm:$0xff]
    %v78 = vld [vmem:[#allocation5 + $0x8] sm:$0xff]
    %v79 = vadd.f32 %v75, %v77
    %v80 = vadd.f32 %v76, %v78
    %v81 = vld [vmem:[#allocation2] sm:$0xff]
    %v82 = vld [vmem:[#allocation2 + $0x8] sm:$0xff]
    %v83 = vadd.f32 %v81, %v79
    %v84 = vadd.f32 %v82, %v80
    %85 = vst [vmem:[#allocation10] sm:$0xff] %v83
    %86 = vst [vmem:[#allocation10 + $0x8] sm:$0xff] %v84
    // Predicated region
    $region34: #{tpu_custom_call.1} parent=1 // pred_check
      _
    $region35: #{tpu_custom_call.1} parent=1 // pred_check_branch
      %88 = sbr.rel (0) target = $region37
    $region36: #{tpu_custom_call.1} parent=1 // pred_region
      %s90 = ssub.s32 256, 256
      %91 = vsyncadd [#allocation4], %s90
      %s93 = sshll.u32 [#allocation10], 4
      %s94 = int_to_ptr.vmem [resolvable:$true] %s93
      %96 = dma.vmem_to_hbm [thread:$0]  %s94, 256, %s4, [#allocation4]
    $region37: #{tpu_custom_call.1} parent=1 // pred_fallthru
      _
    // Predicated region
    $region38: #{tpu_custom_call.1} parent=1 // pred_check
      _
    $region39: #{tpu_custom_call.1} parent=1 // pred_check_branch
      %98 = sbr.rel (0) target = $region41
    $region40: #{tpu_custom_call.1} parent=1 // pred_region
      %99 = dma.done [#allocation4], 256
    $region41: #{tpu_custom_call.1} parent=1 // pred_fallthru
      _
    %100 = vsyncpa [#allocation3], 1
    %101 = vsyncpa [#allocation6], 1
    %102 = vsyncpa [#allocation9], 1
    %103 = vsyncpa [#allocation4], 1

</llo_original>
